<compile_context>
chip_gen: v5e
topology: v5e:2x2
jax: 0.10.0
libtpu: 0.0.40
codegen_flags: <defaults>
</compile_context>

<pallas_src>
import functools
import math

import jax
import jax.numpy as jnp
from jax.experimental import pallas as pl
from jax.experimental.pallas import tpu as pltpu


def _down_paddings(spatial_dims, K):
    """Padding rule from Resample.forward(..., 'down')."""
    return tuple(
        math.ceil(K / 2) - 1 if dim % 2 == 0 else math.ceil((K + 1) / 2) - 1
        for dim in spatial_dims
    )


def _downsample_kernel(x_ref, o_ref, *, k1n, Ho, Wo):
    # x_ref: (4, TNC, Hh, Wnat) -- the four polyphase slabs of the zero-padded input block,
    #        phase index = 2*(row residue) + (col residue).
    # o_ref: (TNC, Ho, Wo)      -- output block (width on lanes, rows on sublanes).
    K = len(k1n)
    f32 = jnp.float32

    # ---- vertical (row) pass: one intermediate per column phase actually used ----
    col_phases = sorted({q % 2 for q in range(K)})
    v = {}
    for c in col_phases:
        acc = None
        for p in range(K):
            # out row i needs padded row 2i + p == phase (p%2) row (i + p//2): contiguous window.
            tap = x_ref[2 * (p % 2) + c, :, pl.ds(p // 2, Ho), :].astype(f32)
            term = k1n[p] * tap
            acc = term if acc is None else acc + term
        v[c] = acc  # (TNC, Ho, Wnat)

    # ---- horizontal (column) pass ----
    out = None
    for q in range(K):
        b = q // 2
        tap = v[q % 2][:, :, b:b + Wo]  # static slice of a VMEM value
        term = k1n[q] * tap
        out = term if out is None else out + term

    o_ref[...] = out.astype(o_ref.dtype)


@functools.partial(jax.jit, static_argnums=(1,))
def downsample(x, fir_kernel):
    """Equivalent of brever Downsample.forward(x) for NCHW input x. fir_kernel: tuple of floats."""
    # --- normalized separable FIR weights, baked in as Python immediates ---
    k1 = [float(v) for v in fir_kernel]
    K = len(k1)
    s = sum(k1)
    k1n = tuple(v / s for v in k1)  # k1n[p] * k1n[q] == outer(k1, k1)[p, q] / sum(outer(k1, k1))

    N, C, H, W = x.shape
    NC = N * C
    ph, pw = _down_paddings((H, W), K)
    Ho = (H + 2 * ph - K) // 2 + 1
    Wo = (W + 2 * pw - K) // 2 + 1
    HA = (K - 1) // 2          # max intra-phase offset along rows / cols (halo)
    Hh = Ho + HA               # phase-slab height (sublane axis)
    Wnat = Wo + HA             # phase-slab width  (lane axis)

    # --- N*C block size: ~2 MiB of input per grid step, balanced across steps ---
    bytes_per_chan = 4 * Hh * Wnat * x.dtype.itemsize          # four phase slabs per channel
    max_tnc = int(max(1, min(NC, (2 * 1024 * 1024) // bytes_per_chan)))
    if NC >= 2:                                                # >=2 grid steps: pipelining + megacore
        max_tnc = min(max_tnc, (NC + 1) // 2)
    steps = -(-NC // max_tnc)
    TNC = -(-NC // steps)                                      # balanced block size (less pad waste)
    NCp = steps * TNC
    grid = (steps,)

    # --- wrapper glue: zero-pad (conv padding + alignment) and split into the 4 polyphase slabs ---
    tgt_h, tgt_w = 2 * Hh, 2 * Wnat
    xb = jnp.pad(
        x.reshape(NC, H, W),
        ((0, NCp - NC), (ph, max(tgt_h - ph - H, 0)), (pw, max(tgt_w - pw - W, 0))),
    )[:, :tgt_h, :tgt_w]
    # (NCp, 2*Hh, 2*Wnat) -> (4, NCp, Hh, Wnat); phase 2*s + t holds x_pad[:, s::2, t::2].
    xph = jnp.transpose(xb.reshape(NCp, Hh, 2, Wnat, 2), (2, 4, 0, 1, 3)).reshape(
        4, NCp, Hh, Wnat
    )

    kernel_fn = functools.partial(_downsample_kernel, k1n=k1n, Ho=Ho, Wo=Wo)
    out = pl.pallas_call(
        kernel_fn,
        out_shape=jax.ShapeDtypeStruct((NCp, Ho, Wo), x.dtype),
        grid=grid,
        in_specs=[pl.BlockSpec((4, TNC, Hh, Wnat), lambda n: (0, n, 0, 0))],
        out_specs=pl.BlockSpec((TNC, Ho, Wo), lambda n: (n, 0, 0)),
        compiler_params=pltpu.CompilerParams(
            dimension_semantics=("parallel",),
            vmem_limit_bytes=32 * 1024 * 1024,
        ),
    )(xph)

    return out[:NC].reshape(N, C, Ho, Wo)


def _reference(x, fir_kernel):
    """Pure-JAX reference mirroring F.conv2d(groups=C, stride=2) semantics."""
    k1 = jnp.asarray(fir_kernel, dtype=jnp.float32)
    k2 = jnp.outer(k1, k1)
    k2 = k2 / jnp.sum(k2)
    K = int(k2.shape[-1])
    N, C, H, W = x.shape
    ph, pw = _down_paddings((H, W), K)
    w = jnp.tile(k2[None, None], (C, 1, 1, 1))  # (C, 1, K, K) depthwise, identical kernel
    return jax.lax.conv_general_dilated(
        x, w, window_strides=(2, 2), padding=((ph, ph), (pw, pw)),
        dimension_numbers=("NCHW", "OIHW", "NCHW"), feature_group_count=C)


if __name__ == "__main__":
    key_a, key_b = jax.random.split(jax.random.PRNGKey(0))

    # Case 1: even H/W, classic 4-tap FIR kernel.
    fir1 = (1.0, 3.0, 3.0, 1.0)
    x1 = jax.random.normal(key_a, (2, 4, 16, 16), dtype=jnp.float32)   # NCHW
    out1 = jax.block_until_ready(downsample(x1, fir1))
    ref1 = jax.block_until_ready(_reference(x1, fir1))
    assert out1.shape == (2, 4, 8, 8), out1.shape
    err1 = float(jnp.max(jnp.abs(out1 - ref1)))
    assert jnp.allclose(out1, ref1, atol=1e-5, rtol=1e-5), err1

    # Case 2: odd H / even W with an asymmetric odd-length FIR kernel
    # (exercises the other padding branch and the cross-correlation orientation).
    fir2 = (1.0, 2.0, 4.0)
    x2 = jax.random.normal(key_b, (1, 3, 15, 18), dtype=jnp.float32)
    out2 = jax.block_until_ready(downsample(x2, fir2))
    ref2 = jax.block_until_ready(_reference(x2, fir2))
    assert out2.shape == ref2.shape, (out2.shape, ref2.shape)
    err2 = float(jnp.max(jnp.abs(out2 - ref2)))
    assert jnp.allclose(out2, ref2, atol=1e-5, rtol=1e-5), err2

    print("KERNEL_OK")
</pallas_src>

<mosaic_0001>
module attributes {stable_mosaic.version = 11 : i64} {
  func.func @_downsample_kernel(%arg0: i32, %arg1: memref<4x4x9x9xf32, #tpu.memory_space<vmem>>, %arg2: memref<4x8x8xf32, #tpu.memory_space<vmem>>) attributes {dimension_semantics = [#tpu.dimension_semantics<parallel>], iteration_bounds = array<i64: 2>, scalar_prefetch = 0 : i64, scratch_operands = 0 : i64, tpu.core_type = #tpu.core_type<tc>, window_params = [{transform_indices = @transform_0, window_bounds = array<i64: 4, 4, 9, 9>}, {transform_indices = @transform_1, window_bounds = array<i64: 4, 8, 8>}]} {
    %c0 = arith.constant 0 : index
    %c0_0 = arith.constant 0 : index
    %c0_1 = arith.constant 0 : index
    %c0_2 = arith.constant 0 : index
    %0 = vector.load %arg1[%c0, %c0_0, %c0_1, %c0_2] : memref<4x4x9x9xf32, #tpu.memory_space<vmem>>, vector<1x4x8x9xf32>
    %1 = vector.shape_cast %0 : vector<1x4x8x9xf32> to vector<4x8x9xf32>
    %cst = arith.constant 1.250000e-01 : f32
    %2 = vector.broadcast %cst : f32 to vector<4x8x9xf32>
    %3 = arith.mulf %2, %1 : vector<4x8x9xf32>
    %c2 = arith.constant 2 : index
    %c0_3 = arith.constant 0 : index
    %c0_4 = arith.constant 0 : index
    %c0_5 = arith.constant 0 : index
    %4 = vector.load %arg1[%c2, %c0_3, %c0_4, %c0_5] : memref<4x4x9x9xf32, #tpu.memory_space<vmem>>, vector<1x4x8x9xf32>
    %5 = vector.shape_cast %4 : vector<1x4x8x9xf32> to vector<4x8x9xf32>
    %cst_6 = arith.constant 3.750000e-01 : f32
    %6 = vector.broadcast %cst_6 : f32 to vector<4x8x9xf32>
    %7 = arith.mulf %6, %5 : vector<4x8x9xf32>
    %8 = arith.addf %3, %7 : vector<4x8x9xf32>
    %c0_7 = arith.constant 0 : index
    %c0_8 = arith.constant 0 : index
    %c1 = arith.constant 1 : index
    %c0_9 = arith.constant 0 : index
    %9 = vector.load %arg1[%c0_7, %c0_8, %c1, %c0_9] : memref<4x4x9x9xf32, #tpu.memory_space<vmem>>, vector<1x4x8x9xf32>
    %10 = vector.shape_cast %9 : vector<1x4x8x9xf32> to vector<4x8x9xf32>
    %cst_10 = arith.constant 3.750000e-01 : f32
    %11 = vector.broadcast %cst_10 : f32 to vector<4x8x9xf32>
    %12 = arith.mulf %11, %10 : vector<4x8x9xf32>
    %13 = arith.addf %8, %12 : vector<4x8x9xf32>
    %c2_11 = arith.constant 2 : index
    %c0_12 = arith.constant 0 : index
    %c1_13 = arith.constant 1 : index
    %c0_14 = arith.constant 0 : index
    %14 = vector.load %arg1[%c2_11, %c0_12, %c1_13, %c0_14] : memref<4x4x9x9xf32, #tpu.memory_space<vmem>>, vector<1x4x8x9xf32>
    %15 = vector.shape_cast %14 : vector<1x4x8x9xf32> to vector<4x8x9xf32>
    %cst_15 = arith.constant 1.250000e-01 : f32
    %16 = vector.broadcast %cst_15 : f32 to vector<4x8x9xf32>
    %17 = arith.mulf %16, %15 : vector<4x8x9xf32>
    %18 = arith.addf %13, %17 : vector<4x8x9xf32>
    %c1_16 = arith.constant 1 : index
    %c0_17 = arith.constant 0 : index
    %c0_18 = arith.constant 0 : index
    %c0_19 = arith.constant 0 : index
    %19 = vector.load %arg1[%c1_16, %c0_17, %c0_18, %c0_19] : memref<4x4x9x9xf32, #tpu.memory_space<vmem>>, vector<1x4x8x9xf32>
    %20 = vector.shape_cast %19 : vector<1x4x8x9xf32> to vector<4x8x9xf32>
    %cst_20 = arith.constant 1.250000e-01 : f32
    %21 = vector.broadcast %cst_20 : f32 to vector<4x8x9xf32>
    %22 = arith.mulf %21, %20 : vector<4x8x9xf32>
    %c3 = arith.constant 3 : index
    %c0_21 = arith.constant 0 : index
    %c0_22 = arith.constant 0 : index
    %c0_23 = arith.constant 0 : index
    %23 = vector.load %arg1[%c3, %c0_21, %c0_22, %c0_23] : memref<4x4x9x9xf32, #tpu.memory_space<vmem>>, vector<1x4x8x9xf32>
    %24 = vector.shape_cast %23 : vector<1x4x8x9xf32> to vector<4x8x9xf32>
    %cst_24 = arith.constant 3.750000e-01 : f32
    %25 = vector.broadcast %cst_24 : f32 to vector<4x8x9xf32>
    %26 = arith.mulf %25, %24 : vector<4x8x9xf32>
    %27 = arith.addf %22, %26 : vector<4x8x9xf32>
    %c1_25 = arith.constant 1 : index
    %c0_26 = arith.constant 0 : index
    %c1_27 = arith.constant 1 : index
    %c0_28 = arith.constant 0 : index
    %28 = vector.load %arg1[%c1_25, %c0_26, %c1_27, %c0_28] : memref<4x4x9x9xf32, #tpu.memory_space<vmem>>, vector<1x4x8x9xf32>
    %29 = vector.shape_cast %28 : vector<1x4x8x9xf32> to vector<4x8x9xf32>
    %cst_29 = arith.constant 3.750000e-01 : f32
    %30 = vector.broadcast %cst_29 : f32 to vector<4x8x9xf32>
    %31 = arith.mulf %30, %29 : vector<4x8x9xf32>
    %32 = arith.addf %27, %31 : vector<4x8x9xf32>
    %c3_30 = arith.constant 3 : index
    %c0_31 = arith.constant 0 : index
    %c1_32 = arith.constant 1 : index
    %c0_33 = arith.constant 0 : index
    %33 = vector.load %arg1[%c3_30, %c0_31, %c1_32, %c0_33] : memref<4x4x9x9xf32, #tpu.memory_space<vmem>>, vector<1x4x8x9xf32>
    %34 = vector.shape_cast %33 : vector<1x4x8x9xf32> to vector<4x8x9xf32>
    %cst_34 = arith.constant 1.250000e-01 : f32
    %35 = vector.broadcast %cst_34 : f32 to vector<4x8x9xf32>
    %36 = arith.mulf %35, %34 : vector<4x8x9xf32>
    %37 = arith.addf %32, %36 : vector<4x8x9xf32>
    %38 = vector.extract_strided_slice %18 {offsets = [0, 0, 0], sizes = [4, 8, 8], strides = [1, 1, 1]} : vector<4x8x9xf32> to vector<4x8x8xf32>
    %cst_35 = arith.constant 1.250000e-01 : f32
    %39 = vector.broadcast %cst_35 : f32 to vector<4x8x8xf32>
    %40 = arith.mulf %39, %38 : vector<4x8x8xf32>
    %41 = vector.extract_strided_slice %37 {offsets = [0, 0, 0], sizes = [4, 8, 8], strides = [1, 1, 1]} : vector<4x8x9xf32> to vector<4x8x8xf32>
    %cst_36 = arith.constant 3.750000e-01 : f32
    %42 = vector.broadcast %cst_36 : f32 to vector<4x8x8xf32>
    %43 = arith.mulf %42, %41 : vector<4x8x8xf32>
    %44 = arith.addf %40, %43 : vector<4x8x8xf32>
    %45 = vector.extract_strided_slice %18 {offsets = [0, 0, 1], sizes = [4, 8, 8], strides = [1, 1, 1]} : vector<4x8x9xf32> to vector<4x8x8xf32>
    %cst_37 = arith.constant 3.750000e-01 : f32
    %46 = vector.broadcast %cst_37 : f32 to vector<4x8x8xf32>
    %47 = arith.mulf %46, %45 : vector<4x8x8xf32>
    %48 = arith.addf %44, %47 : vector<4x8x8xf32>
    %49 = vector.extract_strided_slice %37 {offsets = [0, 0, 1], sizes = [4, 8, 8], strides = [1, 1, 1]} : vector<4x8x9xf32> to vector<4x8x8xf32>
    %cst_38 = arith.constant 1.250000e-01 : f32
    %50 = vector.broadcast %cst_38 : f32 to vector<4x8x8xf32>
    %51 = arith.mulf %50, %49 : vector<4x8x8xf32>
    %52 = arith.addf %48, %51 : vector<4x8x8xf32>
    %c0_39 = arith.constant 0 : index
    %c0_40 = arith.constant 0 : index
    %c0_41 = arith.constant 0 : index
    %53 = vector.load %arg2[%c0_39, %c0_40, %c0_41] : memref<4x8x8xf32, #tpu.memory_space<vmem>>, vector<4x8x8xf32>
    tpu.vector_store %arg2[%c0_39, %c0_40, %c0_41], %52 {strides = array<i32>} : memref<4x8x8xf32, #tpu.memory_space<vmem>>, vector<4x8x8xf32>,
    return
  }
  func.func @transform_0(%arg0: i32) -> (i32, i32, i32, i32) {
    %c0_i32 = arith.constant 0 : i32
    %c0_i32_0 = arith.constant 0 : i32
    %c0_i32_1 = arith.constant 0 : i32
    %c0_i32_2 = arith.constant 0 : i32
    return %c0_i32, %arg0, %c0_i32_0, %c0_i32_1 : i32, i32, i32, i32
  }
  func.func @transform_1(%arg0: i32) -> (i32, i32, i32) {
    %c0_i32 = arith.constant 0 : i32
    %c0_i32_0 = arith.constant 0 : i32
    %c0_i32_1 = arith.constant 0 : i32
    return %arg0, %c0_i32, %c0_i32_0 : i32, i32, i32
  }
}

</mosaic_0001>

<llo_original>
// kernel: downsample.1
$region0: #{downsample.1}
  #allocation0 [shape = 'u32[]', space=smem, size = 0x4, offset = 0x4, fixed_abs, tag = 'smem constant byte address 0x4 - core index']
  #allocation1 [shape = 'u32[72,128]{1,0:T(1,128)}', space=vmem, size = 0x9000, scoped, tag = 'internal scratch']
  %s0 = inlined_call_operand.vmem [shape: f32[4,8,9,9], index: 0, kind: input, shape index: {}]
  %s1 = inlined_call_operand.hbm [shape: f32[8,8,8], index: 1, kind: output, shape index: {}]
  %s2 = sld [smem:[#allocation0]]
  $region75: #{downsample.1} parent=0
    _
  %s4 = ssub.s32 1, %s2
  %s5 = scalar_select 0, %s4, %s2
  $region1: #{downsample.1} parent=0
    #allocation2 [shape = 'u8[262144]{0}', space=vmem, size = 0x40000, scoped, tag = 'input window, operand 0']
    #allocation3 [shape = 'u8[32768]{0}', space=vmem, size = 0x8000, scoped, tag = 'output window, operand 0']
    #allocation4 [shape = 's32[2]{0}', space=sflag, size = 0x8, scoped, tag = 'scoped memory for downsample.1']
    %6 = vsyncpa [#allocation4], 0
    %s7 = scalar_lea.sflag [#allocation4], 1
    %8 = vsyncpa %s7, 0
    loop: start=0, step=1, limit=4
    $region2: #{downsample.1} parent=1 // loop_pre_header
      _
    $region3: #{downsample.1} parent=1 // loop_header
      %s10 = sphi 0, %s14
      %p11 = scmp.ge.s32.totalorder %s10, 4
      %s20 = sphi 0, %s22
      %s23 = sphi 0, %s20
      %s24 = sphi 0, %s23
      %s40 = sphi 0, %s24
      %s46 = sphi 0, %s48
      %s49 = sphi 0, %s46
      %s50 = sphi 0, %s49
      %s66 = sphi 0, %s50
    $region4: #{downsample.1} parent=1 // loop_header_branch
      %13 = sbr.rel (%p11) target = $region8
    $region5: #{downsample.1} parent=1 // loop_body
      %s15 = ssub.s32 %s10, 1
      %s16 = ssub.s32 %s10, 2
      %s17 = sadd.s32 %s10, 1
      %s18 = ssub.s32 %s10, %s17
      %p19 = scmp.eq.s32.totalorder %s18, 0
      %s21 = sadd.s32 %s20, 1
      %s22 = scalar_select %p19, %s20, %s21
      %p25 = pneg %p19
      %p26 = scmp.eq.s32.totalorder %s10, 1
      %p27 = por %p25, %p26
      %p28 = scmp.ne.s32.totalorder %s20, %s23
      %p29 = scmp.eq.s32.totalorder %s10, 0
      %p30 = por %p28, %p29
      %p31 = scmp.ne.s32.totalorder %s20, %s23
      %p32 = scmp.eq.s32.totalorder %s15, 1
      %p33 = por %p31, %p32
      %p34 = scmp.ne.s32.totalorder %s23, %s24
      %p35 = scmp.eq.s32.totalorder %s15, 0
      %p36 = por %p34, %p35
      %p37 = scmp.ne.s32.totalorder %s23, %s24
      %p38 = scmp.eq.s32.totalorder %s16, 1
      %p39 = por %p37, %p38
      %p41 = scmp.ne.s32.totalorder %s24, %s40
      %p42 = scmp.eq.s32.totalorder %s16, 0
      %p43 = por %p41, %p42
      %s44 = ssub.s32 %s10, %s17
      %p45 = scmp.eq.s32.totalorder %s44, 0
      %s47 = sadd.s32 %s46, 1
      %s48 = scalar_select %p45, %s46, %s47
      %p51 = pneg %p45
      %p52 = scmp.eq.s32.totalorder %s10, 1
      %p53 = por %p51, %p52
      %p54 = scmp.ne.s32.totalorder %s46, %s49
      %p55 = scmp.eq.s32.totalorder %s10, 0
      %p56 = por %p54, %p55
      %p57 = scmp.ne.s32.totalorder %s46, %s49
      %p58 = scmp.eq.s32.totalorder %s15, 1
      %p59 = por %p57, %p58
      %p60 = scmp.ne.s32.totalorder %s49, %s50
      %p61 = scmp.eq.s32.totalorder %s15, 0
      %p62 = por %p60, %p61
      %p63 = scmp.ne.s32.totalorder %s49, %s50
      %p64 = scmp.eq.s32.totalorder %s16, 1
      %p65 = por %p63, %p64
      %p67 = scmp.ne.s32.totalorder %s50, %s66
      %p68 = scmp.eq.s32.totalorder %s16, 0
      %p69 = por %p67, %p68
      %p70 = scmp.le.s32.totalorder 1, %s10
      %p71 = scmp.lt.s32.totalorder %s10, 3
      %p72 = pnand %p70, %p71
      %p73 = pneg %p72
      // Predicated region
      $region9: #{downsample.1} parent=5 // pred_check
        _
      $region10: #{downsample.1} parent=5 // pred_check_branch
        %75 = sbr.rel (%p72) target = $region12
      $region11: #{downsample.1} parent=5 // pred_region
        %s76 = ssub.s32 %s10, 1
      $region12: #{downsample.1} parent=5 // pred_fallthru
        _
      %p77 = scmp.lt.s32.totalorder %s10, 2
      // Predicated region
      $region13: #{downsample.1} parent=5 // pred_check
        %p78 = pneg %p77
      $region14: #{downsample.1} parent=5 // pred_check_branch
        %80 = sbr.rel (%p78) target = $region16
      $region15: #{downsample.1} parent=5 // pred_region
        // Predicated region
        $region17: #{downsample.1} parent=15 // pred_check
          %p81 = pneg %p30
        $region18: #{downsample.1} parent=15 // pred_check_branch
          %83 = sbr.rel (%p81) target = $region20
        $region19: #{downsample.1} parent=15 // pred_region
          %s84 = sand.u32 %s20, 1
          %s85 = sand.u32 %s20, 1
          %s86 = smul.addr %s85, 256
          %s87 = scalar_lea.vmem [#allocation2], %s86
          %s88 = smul.u32 4, %s10
          %s89 = smul.addr %s88, 2
          %s90 = smul.addr %s89, 8
          %s91 = scalar_lea.vmem %s0, %s90
          // Predicated region
          $region21: #{downsample.1} parent=19 // pred_check
            _
          $region22: #{downsample.1} parent=19 // pred_check_branch
            %93 = sbr.rel (0) target = $region24
          $region23: #{downsample.1} parent=19 // pred_region
            // Predicated region
            $region25: #{downsample.1} parent=23 // pred_check
              _
            $region26: #{downsample.1} parent=23 // pred_check_branch
              %95 = sbr.rel (0) target = $region28
            $region27: #{downsample.1} parent=23 // pred_region
              // Predicated region
              $region40: #{downsample.1} parent=27 // pred_check
                _
              $region41: #{downsample.1} parent=27 // pred_check_branch
                %173 = sbr.rel (0) target = $region43
              $region42: #{downsample.1} parent=27 // pred_region
                loop: start=0, step=1, limit=1
                $region44: #{downsample.1} parent=42 // loop_pre_header
                  _
                $region45: #{downsample.1} parent=42 // loop_header
                  %s175 = sphi 0, %s179
                  %p176 = scmp.ge.s32.totalorder %s175, 1
                  %s180 = sphi %s91, %s91
                  %s181 = sphi %s87, %s87
                $region46: #{downsample.1} parent=42 // loop_header_branch
                  %178 = sbr.rel (%p176) target = $region50
                $region47: #{downsample.1} parent=42 // loop_body
                  %v182 = vld [vmem:[%s180] sm:$0xff]
                  %183 = vst [vmem:[%s181] sm:$0xff] %v182
                  %v184 = vld [vmem:[%s180 + $0x8] sm:$0xff]
                  %185 = vst [vmem:[%s181 + $0x8] sm:$0xff] %v184
                  %v186 = vld [vmem:[%s180 + $0x10] sm:$0xff]
                  %187 = vst [vmem:[%s181 + $0x10] sm:$0xff] %v186
                  %v188 = vld [vmem:[%s180 + $0x18] sm:$0xff]
                  %189 = vst [vmem:[%s181 + $0x18] sm:$0xff] %v188
                  %v190 = vld [vmem:[%s180 + $0x20] sm:$0xff]
                  %191 = vst [vmem:[%s181 + $0x20] sm:$0xff] %v190
                  %v192 = vld [vmem:[%s180 + $0x28] sm:$0xff]
                  %193 = vst [vmem:[%s181 + $0x28] sm:$0xff] %v192
                  %v194 = vld [vmem:[%s180 + $0x30] sm:$0xff]
                  %195 = vst [vmem:[%s181 + $0x30] sm:$0xff] %v194
                  %v196 = vld [vmem:[%s180 + $0x38] sm:$0xff]
                  %197 = vst [vmem:[%s181 + $0x38] sm:$0xff] %v196
                  %v198 = vld [vmem:[%s180 + $0x80] sm:$0xff]
                  %199 = vst [vmem:[%s181 + $0x40] sm:$0xff] %v198
                  %v200 = vld [vmem:[%s180 + $0x88] sm:$0xff]
                  %201 = vst [vmem:[%s181 + $0x48] sm:$0xff] %v200
                  %v202 = vld [vmem:[%s180 + $0x90] sm:$0xff]
                  %203 = vst [vmem:[%s181 + $0x50] sm:$0xff] %v202
                  %v204 = vld [vmem:[%s180 + $0x98] sm:$0xff]
                  %205 = vst [vmem:[%s181 + $0x58] sm:$0xff] %v204
                  %v206 = vld [vmem:[%s180 + $0xa0] sm:$0xff]
                  %207 = vst [vmem:[%s181 + $0x60] sm:$0xff] %v206
                  %v208 = vld [vmem:[%s180 + $0xa8] sm:$0xff]
                  %209 = vst [vmem:[%s181 + $0x68] sm:$0xff] %v208
                  %v210 = vld [vmem:[%s180 + $0xb0] sm:$0xff]
                  %211 = vst [vmem:[%s181 + $0x70] sm:$0xff] %v210
                  %v212 = vld [vmem:[%s180 + $0xb8] sm:$0xff]
                  %213 = vst [vmem:[%s181 + $0x78] sm:$0xff] %v212
                  %v214 = vld [vmem:[%s180 + $0x100] sm:$0xff]
                  %215 = vst [vmem:[%s181 + $0x80] sm:$0xff] %v214
                  %v216 = vld [vmem:[%s180 + $0x108] sm:$0xff]
                  %217 = vst [vmem:[%s181 + $0x88] sm:$0xff] %v216
                  %v218 = vld [vmem:[%s180 + $0x110] sm:$0xff]
                  %219 = vst [vmem:[%s181 + $0x90] sm:$0xff] %v218
                  %v220 = vld [vmem:[%s180 + $0x118] sm:$0xff]
                  %221 = vst [vmem:[%s181 + $0x98] sm:$0xff] %v220
                  %v222 = vld [vmem:[%s180 + $0x120] sm:$0xff]
                  %223 = vst [vmem:[%s181 + $0xa0] sm:$0xff] %v222
                  %v224 = vld [vmem:[%s180 + $0x128] sm:$0xff]
                  %225 = vst [vmem:[%s181 + $0xa8] sm:$0xff] %v224
                  %v226 = vld [vmem:[%s180 + $0x130] sm:$0xff]
                  %227 = vst [vmem:[%s181 + $0xb0] sm:$0xff] %v226
                  %v228 = vld [vmem:[%s180 + $0x138] sm:$0xff]
                  %229 = vst [vmem:[%s181 + $0xb8] sm:$0xff] %v228
                  %v230 = vld [vmem:[%s180 + $0x180] sm:$0xff]
                  %231 = vst [vmem:[%s181 + $0xc0] sm:$0xff] %v230
                  %v232 = vld [vmem:[%s180 + $0x188] sm:$0xff]
                  %233 = vst [vmem:[%s181 + $0xc8] sm:$0xff] %v232
                  %v234 = vld [vmem:[%s180 + $0x190] sm:$0xff]
                  %235 = vst [vmem:[%s181 + $0xd0] sm:$0xff] %v234
                  %v236 = vld [vmem:[%s180 + $0x198] sm:$0xff]
                  %237 = vst [vmem:[%s181 + $0xd8] sm:$0xff] %v236
                  %v238 = vld [vmem:[%s180 + $0x1a0] sm:$0xff]
                  %239 = vst [vmem:[%s181 + $0xe0] sm:$0xff] %v238
                  %v240 = vld [vmem:[%s180 + $0x1a8] sm:$0xff]
                  %241 = vst [vmem:[%s181 + $0xe8] sm:$0xff] %v240
                  %v242 = vld [vmem:[%s180 + $0x1b0] sm:$0xff]
                  %243 = vst [vmem:[%s181 + $0xf0] sm:$0xff] %v242
                  %v244 = vld [vmem:[%s180 + $0x1b8] sm:$0xff]
                  %245 = vst [vmem:[%s181 + $0xf8] sm:$0xff] %v244
                $region48: #{downsample.1} parent=42 // loop_footer
                  %s179 = sadd.s32 1, %s175
                $region49: #{downsample.1} parent=42 // loop_footer_branch
                  %174 = sbr.rel target = $region45
                $region50: #{downsample.1} parent=42 // loop_exit
                  _
              $region43: #{downsample.1} parent=27 // pred_fallthru
                _
              // Predicated region
              $region51: #{downsample.1} parent=27 // pred_check
                _
              $region52: #{downsample.1} parent=27 // pred_check_branch
                %247 = sbr.rel target = $region54
              $region53: #{downsample.1} parent=27 // pred_region
                _
              $region54: #{downsample.1} parent=27 // pred_fallthru
                _
            $region28: #{downsample.1} parent=23 // pred_fallthru
              _
            // Predicated region
            $region29: #{downsample.1} parent=23 // pred_check
              _
            $region30: #{downsample.1} parent=23 // pred_check_branch
              %97 = sbr.rel target = $region32
            $region31: #{downsample.1} parent=23 // pred_region
              %s99 = ssub.s32 256, 1
              loop: start=0, step=1, limit=1
              $region33: #{downsample.1} parent=31 // loop_pre_header
                _
              $region34: #{downsample.1} parent=31 // loop_header
                %s101 = sphi 0, %s105
                %p102 = scmp.ge.s32.totalorder %s101, 1
                %s106 = sphi %s91, %s91
                %s107 = sphi %s87, %s87
              $region35: #{downsample.1} parent=31 // loop_header_branch
                %104 = sbr.rel (%p102) target = $region39
              $region36: #{downsample.1} parent=31 // loop_body
                %v108 = vld [vmem:[%s106] sm:%s99]
                %109 = vst [vmem:[%s107] sm:%s99] %v108
                %v110 = vld [vmem:[%s106 + $0x8] sm:%s99]
                %111 = vst [vmem:[%s107 + $0x8] sm:%s99] %v110
                %v112 = vld [vmem:[%s106 + $0x10] sm:%s99]
                %113 = vst [vmem:[%s107 + $0x10] sm:%s99] %v112
                %v114 = vld [vmem:[%s106 + $0x18] sm:%s99]
                %115 = vst [vmem:[%s107 + $0x18] sm:%s99] %v114
                %v116 = vld [vmem:[%s106 + $0x20] sm:%s99]
                %117 = vst [vmem:[%s107 + $0x20] sm:%s99] %v116
                %v118 = vld [vmem:[%s106 + $0x28] sm:%s99]
                %119 = vst [vmem:[%s107 + $0x28] sm:%s99] %v118
                %v120 = vld [vmem:[%s106 + $0x30] sm:%s99]
                %121 = vst [vmem:[%s107 + $0x30] sm:%s99] %v120
                %v122 = vld [vmem:[%s106 + $0x38] sm:%s99]
                %123 = vst [vmem:[%s107 + $0x38] sm:%s99] %v122
                %v124 = vld [vmem:[%s106 + $0x80] sm:%s99]
                %125 = vst [vmem:[%s107 + $0x40] sm:%s99] %v124
                %v126 = vld [vmem:[%s106 + $0x88] sm:%s99]
                %127 = vst [vmem:[%s107 + $0x48] sm:%s99] %v126
                %v128 = vld [vmem:[%s106 + $0x90] sm:%s99]
                %129 = vst [vmem:[%s107 + $0x50] sm:%s99] %v128
                %v130 = vld [vmem:[%s106 + $0x98] sm:%s99]
                %131 = vst [vmem:[%s107 + $0x58] sm:%s99] %v130
                %v132 = vld [vmem:[%s106 + $0xa0] sm:%s99]
                %133 = vst [vmem:[%s107 + $0x60] sm:%s99] %v132
                %v134 = vld [vmem:[%s106 + $0xa8] sm:%s99]
                %135 = vst [vmem:[%s107 + $0x68] sm:%s99] %v134
                %v136 = vld [vmem:[%s106 + $0xb0] sm:%s99]
                %137 = vst [vmem:[%s107 + $0x70] sm:%s99] %v136
                %v138 = vld [vmem:[%s106 + $0xb8] sm:%s99]
                %139 = vst [vmem:[%s107 + $0x78] sm:%s99] %v138
                %v140 = vld [vmem:[%s106 + $0x100] sm:%s99]
                %141 = vst [vmem:[%s107 + $0x80] sm:%s99] %v140
                %v142 = vld [vmem:[%s106 + $0x108] sm:%s99]
                %143 = vst [vmem:[%s107 + $0x88] sm:%s99] %v142
                %v144 = vld [vmem:[%s106 + $0x110] sm:%s99]
                %145 = vst [vmem:[%s107 + $0x90] sm:%s99] %v144
                %v146 = vld [vmem:[%s106 + $0x118] sm:%s99]
                %147 = vst [vmem:[%s107 + $0x98] sm:%s99] %v146
                %v148 = vld [vmem:[%s106 + $0x120] sm:%s99]
                %149 = vst [vmem:[%s107 + $0xa0] sm:%s99] %v148
                %v150 = vld [vmem:[%s106 + $0x128] sm:%s99]
                %151 = vst [vmem:[%s107 + $0xa8] sm:%s99] %v150
                %v152 = vld [vmem:[%s106 + $0x130] sm:%s99]
                %153 = vst [vmem:[%s107 + $0xb0] sm:%s99] %v152
                %v154 = vld [vmem:[%s106 + $0x138] sm:%s99]
                %155 = vst [vmem:[%s107 + $0xb8] sm:%s99] %v154
                %v156 = vld [vmem:[%s106 + $0x180] sm:%s99]
                %157 = vst [vmem:[%s107 + $0xc0] sm:%s99] %v156
                %v158 = vld [vmem:[%s106 + $0x188] sm:%s99]
                %159 = vst [vmem:[%s107 + $0xc8] sm:%s99] %v158
                %v160 = vld [vmem:[%s106 + $0x190] sm:%s99]
                %161 = vst [vmem:[%s107 + $0xd0] sm:%s99] %v160
                %v162 = vld [vmem:[%s106 + $0x198] sm:%s99]
                %163 = vst [vmem:[%s107 + $0xd8] sm:%s99] %v162
                %v164 = vld [vmem:[%s106 + $0x1a0] sm:%s99]
                %165 = vst [vmem:[%s107 + $0xe0] sm:%s99] %v164
                %v166 = vld [vmem:[%s106 + $0x1a8] sm:%s99]
                %167 = vst [vmem:[%s107 + $0xe8] sm:%s99] %v166
                %v168 = vld [vmem:[%s106 + $0x1b0] sm:%s99]
                %169 = vst [vmem:[%s107 + $0xf0] sm:%s99] %v168
                %v170 = vld [vmem:[%s106 + $0x1b8] sm:%s99]
                %171 = vst [vmem:[%s107 + $0xf8] sm:%s99] %v170
              $region37: #{downsample.1} parent=31 // loop_footer
                %s105 = sadd.s32 1, %s101
              $region38: #{downsample.1} parent=31 // loop_footer_branch
                %100 = sbr.rel target = $region34
              $region39: #{downsample.1} parent=31 // loop_exit
                _
            $region32: #{downsample.1} parent=23 // pred_fallthru
              _
          $region24: #{downsample.1} parent=19 // pred_fallthru
            _
          %248 = vnop
        $region20: #{downsample.1} parent=15 // pred_fallthru
          _
      $region16: #{downsample.1} parent=5 // pred_fallthru
        _
      %p249 = scmp.le.s32.totalorder 1, %s10
      %p250 = scmp.lt.s32.totalorder %s10, 3
      %p251 = pnand %p249, %p250
      %p252 = pneg %p251
      // Predicated region
      $region55: #{downsample.1} parent=5 // pred_check
        _
      $region56: #{downsample.1} parent=5 // pred_check_branch
        %254 = sbr.rel (%p251) target = $region58
      $region57: #{downsample.1} parent=5 // pred_region
        %s255 = ssub.s32 %s10, 1
        %s256 = sand.u32 %s23, 1
        %s257 = sand.u32 %s23, 1
        %s258 = smul.addr %s257, 256
        %s259 = scalar_lea.vmem [#allocation2], %s258
        // Predicated region
        $region59: #{downsample.1} parent=57 // pred_check
          %p260 = pneg %p36
        $region60: #{downsample.1} parent=57 // pred_check_branch
          %262 = sbr.rel (%p260) target = $region62
        $region61: #{downsample.1} parent=57 // pred_region
          _
        $region62: #{downsample.1} parent=57 // pred_fallthru
          _
        %s263 = sand.u32 %s23, 1
        %s264 = sand.u32 %s23, 1
        %s265 = smul.addr %s264, 256
        %s266 = scalar_lea.vmem [#allocation2], %s265
        %p267 = pneg %p36
        %p268 = pneg %p33
        %p269 = pneg %p62
        %p270 = pneg %p59
        %s271 = sand.u32 %s49, 1
        %s272 = scalar_lea.sflag [#allocation4], %s271
        %s273 = sand.u32 %s49, 1
        %s274 = smul.addr %s273, 32
        %s275 = scalar_lea.vmem [#allocation3], %s274
        %s276 = smul.u32 4, %s15
        %s277 = smul.u32 4, %s15
        %v278 = vld [vmem:[%s259] sm:$0xff]
        %v279 = vld [vmem:[%s259 + $0x10] sm:$0xff]
        %v280 = vld [vmem:[%s259 + $0x20] sm:$0xff]
        %v281 = vld [vmem:[%s259 + $0x30] sm:$0xff]
        %v282 = vmul.f32 %v278, 0.125
        %v283 = vmul.f32 %v279, 0.125
        %v284 = vmul.f32 %v280, 0.125
        %v285 = vmul.f32 %v281, 0.125
        %s286 = scalar_lea.vmem %s259, 128 [#allocation2]
        %v287 = vld [vmem:[%s286] sm:$0xff]
        %v288 = vld [vmem:[%s286 + $0x10] sm:$0xff]
        %v289 = vld [vmem:[%s286 + $0x20] sm:$0xff]
        %v290 = vld [vmem:[%s286 + $0x30] sm:$0xff]
        %v291 = vmul.f32 %v287, 0.375
        %v292 = vmul.f32 %v288, 0.375
        %v293 = vmul.f32 %v289, 0.375
        %v294 = vmul.f32 %v290, 0.375
        %v295 = vadd.f32 %v282, %v291
        %v296 = vadd.f32 %v283, %v292
        %v297 = vadd.f32 %v284, %v293
        %v298 = vadd.f32 %v285, %v294
        %v299 = vld [vmem:[%s259 + $0x1] sm:$0xff]
        %v300 = vld [vmem:[%s259 + $0x11] sm:$0xff]
        %v301 = vld [vmem:[%s259 + $0x21] sm:$0xff]
        %v302 = vld [vmem:[%s259 + $0x31] sm:$0xff]
        %v303 = vmul.f32 %v299, 0.375
        %v304 = vmul.f32 %v300, 0.375
        %v305 = vmul.f32 %v301, 0.375
        %v306 = vmul.f32 %v302, 0.375
        %v307 = vadd.f32 %v295, %v303
        %v308 = vadd.f32 %v296, %v304
        %v309 = vadd.f32 %v297, %v305
        %v310 = vadd.f32 %v298, %v306
        %v311 = vld [vmem:[%s286 + $0x1] sm:$0xff]
        %v312 = vld [vmem:[%s286 + $0x11] sm:$0xff]
        %v313 = vld [vmem:[%s286 + $0x21] sm:$0xff]
        %v314 = vld [vmem:[%s286 + $0x31] sm:$0xff]
        %v315 = vmul.f32 %v311, 0.125
        %v316 = vmul.f32 %v312, 0.125
        %v317 = vmul.f32 %v313, 0.125
        %v318 = vmul.f32 %v314, 0.125
        %v319 = vadd.f32 %v307, %v315
        %v320 = vadd.f32 %v308, %v316
        %v321 = vadd.f32 %v309, %v317
        %v322 = vadd.f32 %v310, %v318
        %s323 = scalar_lea.vmem %s259, 64 [#allocation2]
        %v324 = vld [vmem:[%s323] sm:$0xff]
        %v325 = vld [vmem:[%s323 + $0x10] sm:$0xff]
        %v326 = vld [vmem:[%s323 + $0x20] sm:$0xff]
        %v327 = vld [vmem:[%s323 + $0x30] sm:$0xff]
        %v328 = vmul.f32 %v324, 0.125
        %v329 = vmul.f32 %v325, 0.125
        %v330 = vmul.f32 %v326, 0.125
        %v331 = vmul.f32 %v327, 0.125
        %s332 = scalar_lea.vmem %s259, 192 [#allocation2]
        %v333 = vld [vmem:[%s332] sm:$0xff]
        %v334 = vld [vmem:[%s332 + $0x10] sm:$0xff]
        %v335 = vld [vmem:[%s332 + $0x20] sm:$0xff]
        %v336 = vld [vmem:[%s332 + $0x30] sm:$0xff]
        %v337 = vmul.f32 %v333, 0.375
        %v338 = vmul.f32 %v334, 0.375
        %v339 = vmul.f32 %v335, 0.375
        %v340 = vmul.f32 %v336, 0.375
        %v341 = vadd.f32 %v328, %v337
        %v342 = vadd.f32 %v329, %v338
        %v343 = vadd.f32 %v330, %v339
        %v344 = vadd.f32 %v331, %v340
        %v345 = vld [vmem:[%s323 + $0x1] sm:$0xff]
        %v346 = vld [vmem:[%s323 + $0x11] sm:$0xff]
        %v347 = vld [vmem:[%s323 + $0x21] sm:$0xff]
        %v348 = vld [vmem:[%s323 + $0x31] sm:$0xff]
        %v349 = vmul.f32 %v345, 0.375
        %v350 = vmul.f32 %v346, 0.375
        %v351 = vmul.f32 %v347, 0.375
        %v352 = vmul.f32 %v348, 0.375
        %v353 = vadd.f32 %v341, %v349
        %v354 = vadd.f32 %v342, %v350
        %v355 = vadd.f32 %v343, %v351
        %v356 = vadd.f32 %v344, %v352
        %v357 = vld [vmem:[%s332 + $0x1] sm:$0xff]
        %v358 = vld [vmem:[%s332 + $0x11] sm:$0xff]
        %v359 = vld [vmem:[%s332 + $0x21] sm:$0xff]
        %v360 = vld [vmem:[%s332 + $0x31] sm:$0xff]
        %v361 = vmul.f32 %v357, 0.125
        %v362 = vmul.f32 %v358, 0.125
        %v363 = vmul.f32 %v359, 0.125
        %v364 = vmul.f32 %v360, 0.125
        %v365 = vadd.f32 %v353, %v361
        %v366 = vadd.f32 %v354, %v362
        %v367 = vadd.f32 %v355, %v363
        %v368 = vadd.f32 %v356, %v364
        %v369 = vmul.f32 %v319, 0.125
        %v370 = vmul.f32 %v320, 0.125
        %v371 = vmul.f32 %v321, 0.125
        %v372 = vmul.f32 %v322, 0.125
        %v373 = vmul.f32 %v365, 0.375
        %v374 = vmul.f32 %v366, 0.375
        %v375 = vmul.f32 %v367, 0.375
        %v376 = vmul.f32 %v368, 0.375
        %v377 = vadd.f32 %v369, %v373
        %v378 = vadd.f32 %v370, %v374
        %v379 = vadd.f32 %v371, %v375
        %v380 = vadd.f32 %v372, %v376
        %v381 = vmul.f32 %v319, 0.375
        %v382 = vmul.f32 %v320, 0.375
        %v383 = vmul.f32 %v321, 0.375
        %v384 = vmul.f32 %v322, 0.375
        %389 = vrot.lane.b32.xlu0 %v381, 127
        %v390 = vpop.permute.xlu0 %389
        %391 = vrot.lane.b32.xlu0 %v382, 127
        %v392 = vpop.permute.xlu0 %391
        %393 = vrot.lane.b32.xlu0 %v383, 127
        %v394 = vpop.permute.xlu0 %393
        %395 = vrot.lane.b32.xlu0 %v384, 127
        %v396 = vpop.permute.xlu0 %395
        %v401 = vadd.f32 %v377, %v390
        %v402 = vadd.f32 %v378, %v392
        %v403 = vadd.f32 %v379, %v394
        %v404 = vadd.f32 %v380, %v396
        %v405 = vmul.f32 %v365, 0.125
        %v406 = vmul.f32 %v366, 0.125
        %v407 = vmul.f32 %v367, 0.125
        %v408 = vmul.f32 %v368, 0.125
        %413 = vrot.lane.b32.xlu0 %v405, 127
        %v414 = vpop.permute.xlu0 %413
        %415 = vrot.lane.b32.xlu0 %v406, 127
        %v416 = vpop.permute.xlu0 %415
        %417 = vrot.lane.b32.xlu0 %v407, 127
        %v418 = vpop.permute.xlu0 %417
        %419 = vrot.lane.b32.xlu0 %v408, 127
        %v420 = vpop.permute.xlu0 %419
        %v425 = vadd.f32 %v401, %v414
        %v426 = vadd.f32 %v402, %v416
        %v427 = vadd.f32 %v403, %v418
        %v428 = vadd.f32 %v404, %v420
        %vm429 = vcmask 64512
        %430 = vst.msk [vmem:[%s275] sm:$0xff] %vm429, %v425
        %431 = vst.msk [vmem:[%s275 + $0x8] sm:$0xff] %vm429, %v426
        %432 = vst.msk [vmem:[%s275 + $0x10] sm:$0xff] %vm429, %v427
        %433 = vst.msk [vmem:[%s275 + $0x18] sm:$0xff] %vm429, %v428
        %s434 = sand.u32 %s49, 1
        %s435 = scalar_lea.sflag [#allocation4], %s434
        %s436 = sand.u32 %s49, 1
        %s437 = smul.addr %s436, 32
        %s438 = scalar_lea.vmem [#allocation3], %s437
        // Predicated region
        $region63: #{downsample.1} parent=57 // pred_check
          %p439 = pneg %p59
        $region64: #{downsample.1} parent=57 // pred_check_branch
          %441 = sbr.rel (%p439) target = $region66
        $region65: #{downsample.1} parent=57 // pred_region
          %s442 = smul.u32 4, %s15
          %444 = vsyncadd %s435, 0
          %s445 = smul.addr %s442, 8
          %s446 = scalar_lea.hbm %s1, %s445
          %s447 = sshll.u32 %s438, 4
          %s448 = int_to_ptr.vmem [resolvable:$true] %s447
          %s449 = sshll.u32 %s446, 4
          %s450 = int_to_ptr.hbm [resolvable:$true] %s449
          %455 = dma.vmem_to_hbm [thread:$0]  %s448, 512, %s450, %s435, 128, 128, 8
        $region66: #{downsample.1} parent=57 // pred_fallthru
          _
      $region58: #{downsample.1} parent=5 // pred_fallthru
        _
      %p456 = scmp.le.s32.totalorder 2, %s10
      // Predicated region
      $region67: #{downsample.1} parent=5 // pred_check
        %p457 = pneg %p456
      $region68: #{downsample.1} parent=5 // pred_check_branch
        %459 = sbr.rel (%p457) target = $region70
      $region69: #{downsample.1} parent=5 // pred_region
        %s460 = ssub.s32 %s10, 2
        // Predicated region
        $region71: #{downsample.1} parent=69 // pred_check
          %p461 = pneg %p65
        $region72: #{downsample.1} parent=69 // pred_check_branch
          %463 = sbr.rel (%p461) target = $region74
        $region73: #{downsample.1} parent=69 // pred_region
          %s464 = sand.u32 %s50, 1
          %s465 = scalar_lea.sflag [#allocation4], %s464
          %s466 = sand.u32 %s50, 1
          %s467 = smul.addr %s466, 32
          %s468 = scalar_lea.vmem [#allocation3], %s467
          %470 = dma.done %s465, 512
        $region74: #{downsample.1} parent=69 // pred_fallthru
          _
      $region70: #{downsample.1} parent=5 // pred_fallthru
        _
    $region6: #{downsample.1} parent=1 // loop_footer
      %s14 = sadd.s32 1, %s10
    $region7: #{downsample.1} parent=1 // loop_footer_branch
      %9 = sbr.rel target = $region3
    $region8: #{downsample.1} parent=1 // loop_exit
      _
    %471 = vsyncpa [#allocation4], 1
    %s472 = scalar_lea.sflag [#allocation4], 1
    %473 = vsyncpa %s472, 1

</llo_original>
